<compile_context>
chip_gen: v6e
topology: v6e:2x2x1
jax: 0.10.0
libtpu: 0.0.40
codegen_flags: <defaults>
</compile_context>

<pallas_src>
from functools import partial

import jax
import jax.numpy as jnp
from jax.experimental import pallas as pl
from jax.experimental.pallas import tpu as pltpu


def _round_up(a, b):
    return (a + b - 1) // b * b


def _gat_attn_kernel(xw_ref, asrc_ref, adst_ref, mask_ref, bias_ref, o_ref,
                     *, heads, c_out):
    # xw_ref   : (Nt_pad, H*Cout) bf16   resident (all source-node features)
    # asrc_ref : (H, Nt_pad)      f32    resident, lane-major (no in-loop transpose)
    # adst_ref : (Tm, H)          f32    this dst-row tile
    # mask_ref : (Tm, Nt_pad)     bf16   additive mask: 0 edge/self-loop, -1e30 else
    # bias_ref : (1, H*Cout)      f32    resident
    # o_ref    : (Tm, H*Cout)     f32
    xw = xw_ref[...]                                   # bf16
    asrc = asrc_ref[...]                               # (H, Nt_pad) f32
    adst = adst_ref[...]                               # (Tm, H)     f32
    mask = mask_ref[...].astype(jnp.float32)           # (Tm, Nt_pad)
    bias = bias_ref[...]                               # (1, H*Cout)

    for h in range(heads):
        # e[i, j] = LeakyReLU(alpha_dst[i, h] + alpha_src[j, h]) + mask[i, j]
        e = adst[:, h:h + 1] + asrc[h:h + 1, :]        # (Tm, Nt_pad)
        e = jnp.where(e > 0, e, 0.2 * e)               # LeakyReLU(0.2), f32 on VPU
        e = e + mask                                   # additive mask (no select)

        m = jnp.max(e, axis=-1, keepdims=True)         # finite (self-loop present)
        p = jnp.exp(e - m)                             # masked entries underflow to 0
        s = jnp.sum(p, axis=-1, keepdims=True)

        # Aggregate with un-normalized probs, fold 1/s in afterwards (EUP vrcp).
        out_h = jnp.dot(p.astype(jnp.bfloat16),
                        xw[:, h * c_out:(h + 1) * c_out],
                        preferred_element_type=jnp.float32)   # (Tm, Cout)
        inv_s = pl.reciprocal(s, approx=True)
        o_ref[:, h * c_out:(h + 1) * c_out] = (
            out_h * inv_s + bias[:, h * c_out:(h + 1) * c_out]
        ).astype(o_ref.dtype)


def init_gat_params(key, in_channels, out_channels, heads):
    k1, k2, k3 = jax.random.split(key, 3)
    scale_w = 1.0 / jnp.sqrt(jnp.float32(in_channels))
    W = jax.random.normal(k1, (in_channels, heads * out_channels), jnp.float32) * scale_w
    att_src = jax.random.normal(k2, (heads, out_channels), jnp.float32) * 0.1
    att_dst = jax.random.normal(k3, (heads, out_channels), jnp.float32) * 0.1
    bias = jnp.zeros((heads * out_channels,), jnp.float32)
    return dict(W=W, att_src=att_src, att_dst=att_dst, bias=bias)


def gat_layer_forward(x, edge_index, params, *, out_channels, heads, block_rows=128):
    """x: (B, N, Cin) float32; edge_index: (2, E) int32 [src; dst] in global node ids."""
    B, N, Cin = x.shape
    Nt = B * N
    HC = heads * out_channels

    # --- small projections in XLA (cheap relative to the O(Nt^2) softmax) ------
    x_flat = x.reshape(Nt, Cin).astype(jnp.float32)
    xw = x_flat @ params["W"]                                        # (Nt, HC) f32
    xw_r = xw.reshape(Nt, heads, out_channels)
    alpha_src = jnp.einsum("nhc,hc->nh", xw_r, params["att_src"])    # (Nt, H)
    alpha_dst = jnp.einsum("nhc,hc->nh", xw_r, params["att_dst"])    # (Nt, H)

    # --- padding / tiling ------------------------------------------------------
    Tm = int(block_rows)
    assert Tm % 16 == 0, "row tile must be a multiple of 16 (bf16 sublane packing)"
    Nt_pad = max(_round_up(Nt, 128), Tm)
    Nt_pad = _round_up(Nt_pad, Tm)
    pad = Nt_pad - Nt

    xw_p = jnp.pad(xw, ((0, pad), (0, 0))).astype(jnp.bfloat16)      # (Nt_pad, HC)
    asrc_p = jnp.pad(alpha_src, ((0, pad), (0, 0))).T                # (H, Nt_pad) f32
    adst_p = jnp.pad(alpha_dst, ((0, pad), (0, 0)))                  # (Nt_pad, H) f32

    # Additive mask bias: 0 for edges + self-loops, -1e30 elsewhere; bf16 halves
    # the largest HBM/VMEM tenant. Self-loops on the full diagonal also keep the
    # padded rows' softmax well-defined (their outputs are sliced away).
    src, dst = edge_index[0], edge_index[1]
    mask = jnp.full((Nt_pad, Nt_pad), -1e30, jnp.float32)
    mask = mask.at[dst, src].set(0.0)
    diag = jnp.arange(Nt_pad)
    mask = mask.at[diag, diag].set(0.0)
    mask = mask.astype(jnp.bfloat16)

    bias2d = params["bias"].reshape(1, HC).astype(jnp.float32)

    grid = (Nt_pad // Tm,)

    # Explicit VMEM budget: double-buffered tiles + resident tensors + f32 temps.
    vmem_bytes = (
        2 * (Tm * Nt_pad * 2)          # mask tile (bf16), double buffered
        + 2 * (Tm * heads * 4)         # alpha_dst tile
        + 2 * (Tm * HC * 4)            # output tile
        + 2 * (Nt_pad * HC * 2)        # resident xw (bf16)
        + 2 * (heads * Nt_pad * 4)     # resident alpha_src
        + 2 * (HC * 4)                 # bias
        + 6 * (Tm * Nt_pad * 4)        # in-kernel f32 temps (e, p, ...)
        + (2 << 20)                    # headroom
    )
    vmem_bytes = int(min(vmem_bytes, 100 * 1024 * 1024))

    kernel = partial(_gat_attn_kernel, heads=heads, c_out=out_channels)

    out_pad = pl.pallas_call(
        kernel,
        out_shape=jax.ShapeDtypeStruct((Nt_pad, HC), jnp.float32),
        grid=grid,
        in_specs=[
            pl.BlockSpec((Nt_pad, HC), lambda i: (0, 0)),   # xw (resident)
            pl.BlockSpec((heads, Nt_pad), lambda i: (0, 0)),  # alpha_src (resident)
            pl.BlockSpec((Tm, heads), lambda i: (i, 0)),    # alpha_dst tile
            pl.BlockSpec((Tm, Nt_pad), lambda i: (i, 0)),   # mask tile
            pl.BlockSpec((1, HC), lambda i: (0, 0)),        # bias (resident)
        ],
        out_specs=pl.BlockSpec((Tm, HC), lambda i: (i, 0)),
        compiler_params=pltpu.CompilerParams(
            dimension_semantics=("parallel",),
            vmem_limit_bytes=vmem_bytes,
        ),
    )(xw_p, asrc_p, adst_p, mask, bias2d)

    return out_pad[:Nt].reshape(B, N, HC)


def gat_reference(x, edge_index, params, *, out_channels, heads):
    """Pure-JAX dense reference (PyG GATConv semantics) for correctness check."""
    B, N, Cin = x.shape
    Nt = B * N
    xw = x.reshape(Nt, Cin) @ params["W"]
    xw_r = xw.reshape(Nt, heads, out_channels)
    a_src = jnp.einsum("nhc,hc->nh", xw_r, params["att_src"])
    a_dst = jnp.einsum("nhc,hc->nh", xw_r, params["att_dst"])
    src, dst = edge_index[0], edge_index[1]
    adj = jnp.zeros((Nt, Nt), bool)
    adj = adj.at[dst, src].set(True)
    adj = adj.at[jnp.arange(Nt), jnp.arange(Nt)].set(True)
    e = a_dst[:, None, :] + a_src[None, :, :]                  # (i, j, h)
    e = jnp.where(e > 0, e, 0.2 * e)
    e = jnp.where(adj[:, :, None], e, -jnp.inf)
    attn = jax.nn.softmax(e, axis=1)                           # over in-neighbors j
    out = jnp.einsum("ijh,jhc->ihc", attn, xw_r)
    out = out.reshape(Nt, heads * out_channels) + params["bias"]
    return out.reshape(B, N, heads * out_channels)


if __name__ == "__main__":
    B, N = 2, 8
    in_channels, out_channels, heads = 4, 8, 2

    key = jax.random.PRNGKey(0)
    kx, kp = jax.random.split(key)
    x = jax.random.normal(kx, (B, N, in_channels), jnp.float32)

    # Deterministic bidirectional ring graph inside each of the B sub-graphs
    # (global node indexing), matching the module's (2, E) edge_index format.
    srcs, dsts = [], []
    for b in range(B):
        for i in range(N):
            a = b * N + i
            c = b * N + (i + 1) % N
            srcs += [a, c]
            dsts += [c, a]
    edge_index = jnp.array([srcs, dsts], dtype=jnp.int32)      # (2, 32)

    params = init_gat_params(kp, in_channels, out_channels, heads)

    out = gat_layer_forward(x, edge_index, params,
                            out_channels=out_channels, heads=heads,
                            block_rows=64)                     # 2 row-tiles at this size
    out = jax.block_until_ready(out)

    assert out.shape == (B, N, heads * out_channels)
    assert bool(jnp.all(jnp.isfinite(out)))

    ref = gat_reference(x, edge_index, params,
                        out_channels=out_channels, heads=heads)
    # bf16 matmul operands + approx reciprocal -> loose-ish tolerance.
    assert bool(jnp.allclose(out, ref, rtol=5e-2, atol=5e-2)), (
        float(jnp.max(jnp.abs(out - ref))))

    print("KERNEL_OK")
</pallas_src>

<mosaic_0001>
module attributes {stable_mosaic.version = 11 : i64} {
  func.func @_gat_attn_kernel(%arg0: i32, %arg1: memref<128x16xbf16, #tpu.memory_space<vmem>>, %arg2: memref<2x128xf32, #tpu.memory_space<vmem>>, %arg3: memref<64x2xf32, #tpu.memory_space<vmem>>, %arg4: memref<64x128xbf16, #tpu.memory_space<vmem>>, %arg5: memref<1x16xf32, #tpu.memory_space<vmem>>, %arg6: memref<64x16xf32, #tpu.memory_space<vmem>>) attributes {dimension_semantics = [#tpu.dimension_semantics<parallel>], iteration_bounds = array<i64: 2>, scalar_prefetch = 0 : i64, scratch_operands = 0 : i64, tpu.core_type = #tpu.core_type<tc>, window_params = [{pipeline_mode = #tpu.pipeline_mode<synchronous>, transform_indices = @transform_0, window_bounds = array<i64: 128, 16>}, {pipeline_mode = #tpu.pipeline_mode<synchronous>, transform_indices = @transform_1, window_bounds = array<i64: 2, 128>}, {transform_indices = @transform_2, window_bounds = array<i64: 64, 2>}, {transform_indices = @transform_3, window_bounds = array<i64: 64, 128>}, {pipeline_mode = #tpu.pipeline_mode<synchronous>, transform_indices = @transform_4, window_bounds = array<i64: 1, 16>}, {transform_indices = @transform_5, window_bounds = array<i64: 64, 16>}]} {
    %c0 = arith.constant 0 : index
    %c0_0 = arith.constant 0 : index
    %0 = vector.load %arg1[%c0, %c0_0] : memref<128x16xbf16, #tpu.memory_space<vmem>>, vector<128x16xbf16>
    %c0_1 = arith.constant 0 : index
    %c0_2 = arith.constant 0 : index
    %1 = vector.load %arg2[%c0_1, %c0_2] : memref<2x128xf32, #tpu.memory_space<vmem>>, vector<2x128xf32>
    %c0_3 = arith.constant 0 : index
    %c0_4 = arith.constant 0 : index
    %2 = vector.load %arg3[%c0_3, %c0_4] : memref<64x2xf32, #tpu.memory_space<vmem>>, vector<64x2xf32>
    %c0_5 = arith.constant 0 : index
    %c0_6 = arith.constant 0 : index
    %3 = vector.load %arg4[%c0_5, %c0_6] : memref<64x128xbf16, #tpu.memory_space<vmem>>, vector<64x128xbf16>
    %4 = arith.extf %3 : vector<64x128xbf16> to vector<64x128xf32>
    %c0_7 = arith.constant 0 : index
    %c0_8 = arith.constant 0 : index
    %5 = vector.load %arg5[%c0_7, %c0_8] : memref<1x16xf32, #tpu.memory_space<vmem>>, vector<1x16xf32>
    %6 = vector.extract_strided_slice %2 {offsets = [0, 0], sizes = [64, 1], strides = [1, 1]} : vector<64x2xf32> to vector<64x1xf32>
    %7 = vector.extract_strided_slice %1 {offsets = [0, 0], sizes = [1, 128], strides = [1, 1]} : vector<2x128xf32> to vector<1x128xf32>
    %8 = vector.broadcast %6 : vector<64x1xf32> to vector<64x128xf32>
    %9 = vector.broadcast %7 : vector<1x128xf32> to vector<64x128xf32>
    %10 = arith.addf %8, %9 : vector<64x128xf32>
    %cst = arith.constant 0.000000e+00 : f32
    %11 = vector.broadcast %cst : f32 to vector<64x128xf32>
    %12 = arith.cmpf ogt, %10, %11 : vector<64x128xf32>
    %cst_9 = arith.constant 2.000000e-01 : f32
    %13 = vector.broadcast %cst_9 : f32 to vector<64x128xf32>
    %14 = arith.mulf %13, %10 : vector<64x128xf32>
    %15 = arith.select %12, %10, %14 : vector<64x128xi1>, vector<64x128xf32>
    %16 = arith.addf %15, %4 : vector<64x128xf32>
    %cst_10 = arith.constant dense<0xFF800000> : vector<64xf32>
    %17 = vector.multi_reduction <maximumf>, %16, %cst_10 [1] : vector<64x128xf32> to vector<64xf32>
    %18 = vector.shape_cast %17 : vector<64xf32> to vector<64x1xf32>
    %19 = vector.broadcast %18 : vector<64x1xf32> to vector<64x128xf32>
    %20 = arith.subf %16, %19 : vector<64x128xf32>
    %21 = math.exp %20 : vector<64x128xf32>
    %cst_11 = arith.constant dense<0.000000e+00> : vector<64xf32>
    %22 = vector.multi_reduction <add>, %21, %cst_11 [1] : vector<64x128xf32> to vector<64xf32>
    %23 = vector.shape_cast %22 : vector<64xf32> to vector<64x1xf32>
    %24 = arith.truncf %21 : vector<64x128xf32> to vector<64x128xbf16>
    %25 = vector.extract_strided_slice %0 {offsets = [0, 0], sizes = [128, 8], strides = [1, 1]} : vector<128x16xbf16> to vector<128x8xbf16>
    %cst_12 = arith.constant dense<0.000000e+00> : vector<64x8xf32>
    %26 = tpu.matmul %24, %25, %cst_12 {dimension_numbers = #tpu.dot_dimension_numbers<[1], [0], [0], [1], [0, 0, 1, 1], [], []>} : vector<64x128xbf16>, vector<128x8xbf16>, vector<64x8xf32> -> vector<64x8xf32>
    %27 = tpu.reciprocal %23 {approx = true} : vector<64x1xf32> -> vector<64x1xf32>
    %28 = vector.broadcast %27 : vector<64x1xf32> to vector<64x8xf32>
    %29 = arith.mulf %26, %28 : vector<64x8xf32>
    %30 = vector.extract_strided_slice %5 {offsets = [0, 0], sizes = [1, 8], strides = [1, 1]} : vector<1x16xf32> to vector<1x8xf32>
    %31 = vector.broadcast %30 : vector<1x8xf32> to vector<64x8xf32>
    %32 = arith.addf %29, %31 : vector<64x8xf32>
    %c0_13 = arith.constant 0 : index
    %c0_14 = arith.constant 0 : index
    %33 = vector.load %arg6[%c0_13, %c0_14] : memref<64x16xf32, #tpu.memory_space<vmem>>, vector<64x8xf32>
    tpu.vector_store %arg6[%c0_13, %c0_14], %32 {strides = array<i32>} : memref<64x16xf32, #tpu.memory_space<vmem>>, vector<64x8xf32>,
    %34 = vector.extract_strided_slice %2 {offsets = [0, 1], sizes = [64, 1], strides = [1, 1]} : vector<64x2xf32> to vector<64x1xf32>
    %35 = vector.extract_strided_slice %1 {offsets = [1, 0], sizes = [1, 128], strides = [1, 1]} : vector<2x128xf32> to vector<1x128xf32>
    %36 = vector.broadcast %34 : vector<64x1xf32> to vector<64x128xf32>
    %37 = vector.broadcast %35 : vector<1x128xf32> to vector<64x128xf32>
    %38 = arith.addf %36, %37 : vector<64x128xf32>
    %cst_15 = arith.constant 0.000000e+00 : f32
    %39 = vector.broadcast %cst_15 : f32 to vector<64x128xf32>
    %40 = arith.cmpf ogt, %38, %39 : vector<64x128xf32>
    %cst_16 = arith.constant 2.000000e-01 : f32
    %41 = vector.broadcast %cst_16 : f32 to vector<64x128xf32>
    %42 = arith.mulf %41, %38 : vector<64x128xf32>
    %43 = arith.select %40, %38, %42 : vector<64x128xi1>, vector<64x128xf32>
    %44 = arith.addf %43, %4 : vector<64x128xf32>
    %cst_17 = arith.constant dense<0xFF800000> : vector<64xf32>
    %45 = vector.multi_reduction <maximumf>, %44, %cst_17 [1] : vector<64x128xf32> to vector<64xf32>
    %46 = vector.shape_cast %45 : vector<64xf32> to vector<64x1xf32>
    %47 = vector.broadcast %46 : vector<64x1xf32> to vector<64x128xf32>
    %48 = arith.subf %44, %47 : vector<64x128xf32>
    %49 = math.exp %48 : vector<64x128xf32>
    %cst_18 = arith.constant dense<0.000000e+00> : vector<64xf32>
    %50 = vector.multi_reduction <add>, %49, %cst_18 [1] : vector<64x128xf32> to vector<64xf32>
    %51 = vector.shape_cast %50 : vector<64xf32> to vector<64x1xf32>
    %52 = arith.truncf %49 : vector<64x128xf32> to vector<64x128xbf16>
    %53 = vector.extract_strided_slice %0 {offsets = [0, 8], sizes = [128, 8], strides = [1, 1]} : vector<128x16xbf16> to vector<128x8xbf16>
    %cst_19 = arith.constant dense<0.000000e+00> : vector<64x8xf32>
    %54 = tpu.matmul %52, %53, %cst_19 {dimension_numbers = #tpu.dot_dimension_numbers<[1], [0], [0], [1], [0, 0, 1, 1], [], []>} : vector<64x128xbf16>, vector<128x8xbf16>, vector<64x8xf32> -> vector<64x8xf32>
    %55 = tpu.reciprocal %51 {approx = true} : vector<64x1xf32> -> vector<64x1xf32>
    %56 = vector.broadcast %55 : vector<64x1xf32> to vector<64x8xf32>
    %57 = arith.mulf %54, %56 : vector<64x8xf32>
    %58 = vector.extract_strided_slice %5 {offsets = [0, 8], sizes = [1, 8], strides = [1, 1]} : vector<1x16xf32> to vector<1x8xf32>
    %59 = vector.broadcast %58 : vector<1x8xf32> to vector<64x8xf32>
    %60 = arith.addf %57, %59 : vector<64x8xf32>
    %c0_20 = arith.constant 0 : index
    %c8 = arith.constant 8 : index
    %61 = vector.load %arg6[%c0_20, %c8] : memref<64x16xf32, #tpu.memory_space<vmem>>, vector<64x8xf32>
    tpu.vector_store %arg6[%c0_20, %c8], %60 {strides = array<i32>} : memref<64x16xf32, #tpu.memory_space<vmem>>, vector<64x8xf32>,
    return
  }
  func.func @transform_0(%arg0: i32) -> (i32, i32) {
    %c0_i32 = arith.constant 0 : i32
    %c0_i32_0 = arith.constant 0 : i32
    %c0_i32_1 = arith.constant 0 : i32
    return %c0_i32, %c0_i32_0 : i32, i32
  }
  func.func @transform_1(%arg0: i32) -> (i32, i32) {
    %c0_i32 = arith.constant 0 : i32
    %c0_i32_0 = arith.constant 0 : i32
    %c0_i32_1 = arith.constant 0 : i32
    return %c0_i32, %c0_i32_0 : i32, i32
  }
  func.func @transform_2(%arg0: i32) -> (i32, i32) {
    %c0_i32 = arith.constant 0 : i32
    %c0_i32_0 = arith.constant 0 : i32
    return %arg0, %c0_i32 : i32, i32
  }
  func.func @transform_3(%arg0: i32) -> (i32, i32) {
    %c0_i32 = arith.constant 0 : i32
    %c0_i32_0 = arith.constant 0 : i32
    return %arg0, %c0_i32 : i32, i32
  }
  func.func @transform_4(%arg0: i32) -> (i32, i32) {
    %c0_i32 = arith.constant 0 : i32
    %c0_i32_0 = arith.constant 0 : i32
    %c0_i32_1 = arith.constant 0 : i32
    return %c0_i32, %c0_i32_0 : i32, i32
  }
  func.func @transform_5(%arg0: i32) -> (i32, i32) {
    %c0_i32 = arith.constant 0 : i32
    %c0_i32_0 = arith.constant 0 : i32
    return %arg0, %c0_i32 : i32, i32
  }
}

</mosaic_0001>

<llo_original>
// kernel: tpu_custom_call.1
$region0: #{tpu_custom_call.1}
  #allocation0 [shape = 'u32[]', space=smem, size = 0x4, offset = 0x4, fixed_abs, tag = 'smem constant byte address 0x4 - core index']
  #allocation1 [shape = 'u32[144,128]{1,0:T(1,128)}', space=vmem, size = 0x12000, scoped, tag = 'internal scratch']
  %s0 = inlined_call_operand.vmem [shape: bf16[128,16], index: 0, kind: input, shape index: {}]
  %s1 = inlined_call_operand.vmem [shape: f32[2,128], index: 1, kind: input, shape index: {}]
  %s2 = inlined_call_operand.vmem [shape: f32[128,2], index: 2, kind: input, shape index: {}]
  %s3 = inlined_call_operand.vmem [shape: bf16[128,128], index: 3, kind: input, shape index: {}]
  %s4 = inlined_call_operand.vmem [shape: f32[1,16], index: 4, kind: input, shape index: {}]
  %s5 = inlined_call_operand.vmem [shape: f32[128,16], index: 5, kind: output, shape index: {}]
  %s6 = sld [smem:[#allocation0]]
  $region53: #{tpu_custom_call.1} parent=0
    _
  %s8 = ssub.s32 1, %s6
  %s9 = scalar_select 0, %s8, %s6
  loop: start=0, step=1, limit=4
  $region2: #{tpu_custom_call.1} parent=0 // loop_pre_header
    _
  $region3: #{tpu_custom_call.1} parent=0 // loop_header
    %s11 = sphi 0, %s15
    %p12 = scmp.ge.s32.totalorder %s11, 4
    %s19 = sphi 0, %s19
    %s21 = sphi 0, %s19
    %s22 = sphi 0, %s21
    %s36 = sphi 0, %s22
    %s40 = sphi 0, %s40
    %s42 = sphi 0, %s40
    %s43 = sphi 0, %s42
    %s57 = sphi 0, %s43
    %s63 = sphi 0, %s65
    %s66 = sphi 0, %s63
    %s67 = sphi 0, %s66
    %s83 = sphi 0, %s67
    %s89 = sphi 0, %s91
    %s92 = sphi 0, %s89
    %s93 = sphi 0, %s92
    %s109 = sphi 0, %s93
    %s113 = sphi 0, %s113
    %s115 = sphi 0, %s113
    %s116 = sphi 0, %s115
    %s130 = sphi 0, %s116
    %s136 = sphi 0, %s138
    %s139 = sphi 0, %s136
    %s140 = sphi 0, %s139
    %s156 = sphi 0, %s140
  $region4: #{tpu_custom_call.1} parent=0 // loop_header_branch
    %14 = sbr.rel (%p12) target = $region8
  $region5: #{tpu_custom_call.1} parent=0 // loop_body
    %s16 = ssub.s32 %s11, 1
    %s17 = ssub.s32 %s11, 2
    %s18 = sadd.s32 %s11, 1
    %s20 = sadd.s32 %s19, 1
    %p23 = scmp.eq.s32.totalorder %s11, 1
    %p24 = scmp.ne.s32.totalorder %s19, %s21
    %p25 = scmp.eq.s32.totalorder %s11, 0
    %p26 = por %p24, %p25
    %p27 = scmp.ne.s32.totalorder %s19, %s21
    %p28 = scmp.eq.s32.totalorder %s16, 1
    %p29 = por %p27, %p28
    %p30 = scmp.ne.s32.totalorder %s21, %s22
    %p31 = scmp.eq.s32.totalorder %s16, 0
    %p32 = por %p30, %p31
    %p33 = scmp.ne.s32.totalorder %s21, %s22
    %p34 = scmp.eq.s32.totalorder %s17, 1
    %p35 = por %p33, %p34
    %p37 = scmp.ne.s32.totalorder %s22, %s36
    %p38 = scmp.eq.s32.totalorder %s17, 0
    %p39 = por %p37, %p38
    %s41 = sadd.s32 %s40, 1
    %p44 = scmp.eq.s32.totalorder %s11, 1
    %p45 = scmp.ne.s32.totalorder %s40, %s42
    %p46 = scmp.eq.s32.totalorder %s11, 0
    %p47 = por %p45, %p46
    %p48 = scmp.ne.s32.totalorder %s40, %s42
    %p49 = scmp.eq.s32.totalorder %s16, 1
    %p50 = por %p48, %p49
    %p51 = scmp.ne.s32.totalorder %s42, %s43
    %p52 = scmp.eq.s32.totalorder %s16, 0
    %p53 = por %p51, %p52
    %p54 = scmp.ne.s32.totalorder %s42, %s43
    %p55 = scmp.eq.s32.totalorder %s17, 1
    %p56 = por %p54, %p55
    %p58 = scmp.ne.s32.totalorder %s43, %s57
    %p59 = scmp.eq.s32.totalorder %s17, 0
    %p60 = por %p58, %p59
    %s61 = ssub.s32 %s11, %s18
    %p62 = scmp.eq.s32.totalorder %s61, 0
    %s64 = sadd.s32 %s63, 1
    %s65 = scalar_select %p62, %s63, %s64
    %p68 = pneg %p62
    %p69 = scmp.eq.s32.totalorder %s11, 1
    %p70 = por %p68, %p69
    %p71 = scmp.ne.s32.totalorder %s63, %s66
    %p72 = scmp.eq.s32.totalorder %s11, 0
    %p73 = por %p71, %p72
    %p74 = scmp.ne.s32.totalorder %s63, %s66
    %p75 = scmp.eq.s32.totalorder %s16, 1
    %p76 = por %p74, %p75
    %p77 = scmp.ne.s32.totalorder %s66, %s67
    %p78 = scmp.eq.s32.totalorder %s16, 0
    %p79 = por %p77, %p78
    %p80 = scmp.ne.s32.totalorder %s66, %s67
    %p81 = scmp.eq.s32.totalorder %s17, 1
    %p82 = por %p80, %p81
    %p84 = scmp.ne.s32.totalorder %s67, %s83
    %p85 = scmp.eq.s32.totalorder %s17, 0
    %p86 = por %p84, %p85
    %s87 = ssub.s32 %s11, %s18
    %p88 = scmp.eq.s32.totalorder %s87, 0
    %s90 = sadd.s32 %s89, 1
    %s91 = scalar_select %p88, %s89, %s90
    %p94 = pneg %p88
    %p95 = scmp.eq.s32.totalorder %s11, 1
    %p96 = por %p94, %p95
    %p97 = scmp.ne.s32.totalorder %s89, %s92
    %p98 = scmp.eq.s32.totalorder %s11, 0
    %p99 = por %p97, %p98
    %p100 = scmp.ne.s32.totalorder %s89, %s92
    %p101 = scmp.eq.s32.totalorder %s16, 1
    %p102 = por %p100, %p101
    %p103 = scmp.ne.s32.totalorder %s92, %s93
    %p104 = scmp.eq.s32.totalorder %s16, 0
    %p105 = por %p103, %p104
    %p106 = scmp.ne.s32.totalorder %s92, %s93
    %p107 = scmp.eq.s32.totalorder %s17, 1
    %p108 = por %p106, %p107
    %p110 = scmp.ne.s32.totalorder %s93, %s109
    %p111 = scmp.eq.s32.totalorder %s17, 0
    %p112 = por %p110, %p111
    %s114 = sadd.s32 %s113, 1
    %p117 = scmp.eq.s32.totalorder %s11, 1
    %p118 = scmp.ne.s32.totalorder %s113, %s115
    %p119 = scmp.eq.s32.totalorder %s11, 0
    %p120 = por %p118, %p119
    %p121 = scmp.ne.s32.totalorder %s113, %s115
    %p122 = scmp.eq.s32.totalorder %s16, 1
    %p123 = por %p121, %p122
    %p124 = scmp.ne.s32.totalorder %s115, %s116
    %p125 = scmp.eq.s32.totalorder %s16, 0
    %p126 = por %p124, %p125
    %p127 = scmp.ne.s32.totalorder %s115, %s116
    %p128 = scmp.eq.s32.totalorder %s17, 1
    %p129 = por %p127, %p128
    %p131 = scmp.ne.s32.totalorder %s116, %s130
    %p132 = scmp.eq.s32.totalorder %s17, 0
    %p133 = por %p131, %p132
    %s134 = ssub.s32 %s11, %s18
    %p135 = scmp.eq.s32.totalorder %s134, 0
    %s137 = sadd.s32 %s136, 1
    %s138 = scalar_select %p135, %s136, %s137
    %p141 = pneg %p135
    %p142 = scmp.eq.s32.totalorder %s11, 1
    %p143 = por %p141, %p142
    %p144 = scmp.ne.s32.totalorder %s136, %s139
    %p145 = scmp.eq.s32.totalorder %s11, 0
    %p146 = por %p144, %p145
    %p147 = scmp.ne.s32.totalorder %s136, %s139
    %p148 = scmp.eq.s32.totalorder %s16, 1
    %p149 = por %p147, %p148
    %p150 = scmp.ne.s32.totalorder %s139, %s140
    %p151 = scmp.eq.s32.totalorder %s16, 0
    %p152 = por %p150, %p151
    %p153 = scmp.ne.s32.totalorder %s139, %s140
    %p154 = scmp.eq.s32.totalorder %s17, 1
    %p155 = por %p153, %p154
    %p157 = scmp.ne.s32.totalorder %s140, %s156
    %p158 = scmp.eq.s32.totalorder %s17, 0
    %p159 = por %p157, %p158
    %p160 = scmp.le.s32.totalorder 1, %s11
    %p161 = scmp.lt.s32.totalorder %s11, 3
    %p162 = pnand %p160, %p161
    %p163 = pneg %p162
    // Predicated region
    $region9: #{tpu_custom_call.1} parent=5 // pred_check
      _
    $region10: #{tpu_custom_call.1} parent=5 // pred_check_branch
      %165 = sbr.rel (%p162) target = $region12
    $region11: #{tpu_custom_call.1} parent=5 // pred_region
      %s166 = ssub.s32 %s11, 1
      // Predicated region
      $region13: #{tpu_custom_call.1} parent=11 // pred_check
        %p167 = pneg %p32
      $region14: #{tpu_custom_call.1} parent=11 // pred_check_branch
        %169 = sbr.rel (%p167) target = $region16
      $region15: #{tpu_custom_call.1} parent=11 // pred_region
        _
      $region16: #{tpu_custom_call.1} parent=11 // pred_fallthru
        _
      // Predicated region
      $region17: #{tpu_custom_call.1} parent=11 // pred_check
        %p170 = pneg %p53
      $region18: #{tpu_custom_call.1} parent=11 // pred_check_branch
        %172 = sbr.rel (%p170) target = $region20
      $region19: #{tpu_custom_call.1} parent=11 // pred_region
        _
      $region20: #{tpu_custom_call.1} parent=11 // pred_fallthru
        _
      // Predicated region
      $region21: #{tpu_custom_call.1} parent=11 // pred_check
        %p173 = pneg %p126
      $region22: #{tpu_custom_call.1} parent=11 // pred_check_branch
        %175 = sbr.rel (%p173) target = $region24
      $region23: #{tpu_custom_call.1} parent=11 // pred_region
        _
      $region24: #{tpu_custom_call.1} parent=11 // pred_fallthru
        _
    $region12: #{tpu_custom_call.1} parent=5 // pred_fallthru
      _
    %p176 = scmp.lt.s32.totalorder %s11, 2
    // Predicated region
    $region25: #{tpu_custom_call.1} parent=5 // pred_check
      %p177 = pneg %p176
    $region26: #{tpu_custom_call.1} parent=5 // pred_check_branch
      %179 = sbr.rel (%p177) target = $region28
    $region27: #{tpu_custom_call.1} parent=5 // pred_region
      // Predicated region
      $region29: #{tpu_custom_call.1} parent=27 // pred_check
        %p180 = pneg %p73
      $region30: #{tpu_custom_call.1} parent=27 // pred_check_branch
        %182 = sbr.rel (%p180) target = $region32
      $region31: #{tpu_custom_call.1} parent=27 // pred_region
        %s183 = smul.u32 8, %s11
        %p184 = scmp.lt.s32.totalorder %s183, 15
        %s185 = scalar_select %p184, %s183, 15
        %s186 = smul.addr %s185, 8
        %s187 = scalar_lea.vmem %s2, %s186
        %s188 = smul.u32 8, %s11
      $region32: #{tpu_custom_call.1} parent=27 // pred_fallthru
        _
      // Predicated region
      $region33: #{tpu_custom_call.1} parent=27 // pred_check
        %p189 = pneg %p99
      $region34: #{tpu_custom_call.1} parent=27 // pred_check_branch
        %191 = sbr.rel (%p189) target = $region36
      $region35: #{tpu_custom_call.1} parent=27 // pred_region
        %s192 = smul.u32 8, %s11
        %p193 = scmp.lt.s32.totalorder %s192, 15
        %s194 = scalar_select %p193, %s192, 15
        %s195 = smul.addr %s194, 4
        %s196 = scalar_lea.vmem %s3, %s195
        %s197 = smul.u32 8, %s11
      $region36: #{tpu_custom_call.1} parent=27 // pred_fallthru
        _
    $region28: #{tpu_custom_call.1} parent=5 // pred_fallthru
      _
    %p198 = scmp.le.s32.totalorder 1, %s11
    %p199 = scmp.lt.s32.totalorder %s11, 3
    %p200 = pnand %p198, %p199
    %p201 = pneg %p200
    // Predicated region
    $region37: #{tpu_custom_call.1} parent=5 // pred_check
      _
    $region38: #{tpu_custom_call.1} parent=5 // pred_check_branch
      %203 = sbr.rel (%p200) target = $region40
    $region39: #{tpu_custom_call.1} parent=5 // pred_region
      %s204 = ssub.s32 %s11, 1
      %p205 = pneg %p32
      %p206 = pneg %p29
      %p207 = pneg %p53
      %p208 = pneg %p50
      %s209 = smul.u32 8, %s16
      %p210 = scmp.lt.s32.totalorder %s209, 15
      %s211 = scalar_select %p210, %s209, 15
      %s212 = smul.addr %s211, 8
      %s213 = scalar_lea.vmem %s2, %s212
      %p214 = pneg %p79
      %p215 = pneg %p76
      %s216 = smul.u32 8, %s16
      %p217 = scmp.lt.s32.totalorder %s216, 15
      %s218 = scalar_select %p217, %s216, 15
      %s219 = smul.addr %s218, 4
      %s220 = scalar_lea.vmem %s3, %s219
      %p221 = pneg %p105
      %p222 = pneg %p102
      %p223 = pneg %p126
      %p224 = pneg %p123
      %p225 = pneg %p152
      %p226 = pneg %p149
      %s227 = smul.u32 8, %s16
      %p228 = scmp.lt.s32.totalorder %s227, 15
      %s229 = scalar_select %p228, %s227, 15
      %s230 = smul.addr %s229, 8
      %s231 = scalar_lea.vmem %s5, %s230
      %s232 = smul.u32 8, %s16
      %p233 = scmp.lt.s32.totalorder %s232, 15
      %s234 = scalar_select %p233, %s232, 15
      %s235 = smul.addr %s234, 8
      %s236 = scalar_lea.vmem %s2, %s235
      %s237 = smul.u32 8, %s16
      %s238 = smul.u32 8, %s16
      %p239 = scmp.lt.s32.totalorder %s238, 15
      %s240 = scalar_select %p239, %s238, 15
      %s241 = smul.addr %s240, 4
      %s242 = scalar_lea.vmem %s3, %s241
      %s243 = smul.u32 8, %s16
      %s244 = smul.u32 8, %s16
      %p245 = scmp.lt.s32.totalorder %s244, 15
      %s246 = scalar_select %p245, %s244, 15
      %s247 = smul.addr %s246, 8
      %s248 = scalar_lea.vmem %s5, %s247
      %s249 = smul.u32 8, %s16
      %v251 = vld [vmem:[%s0] sm:$0xf]
      %v252 = vld [vmem:[%s0 + $0x4] sm:$0xf]
      %v253 = vld [vmem:[%s0 + $0x8] sm:$0xf]
      %v254 = vld [vmem:[%s0 + $0xc] sm:$0xf]
      %v255 = vld [vmem:[%s0 + $0x10] sm:$0xf]
      %v256 = vld [vmem:[%s0 + $0x14] sm:$0xf]
      %v257 = vld [vmem:[%s0 + $0x18] sm:$0xf]
      %v258 = vld [vmem:[%s0 + $0x1c] sm:$0xf]
      %v259 = vld [vmem:[%s0 + $0x20] sm:$0xf]
      %v260 = vld [vmem:[%s0 + $0x24] sm:$0xf]
      %v261 = vld [vmem:[%s0 + $0x28] sm:$0xf]
      %v262 = vld [vmem:[%s0 + $0x2c] sm:$0xf]
      %v263 = vld [vmem:[%s0 + $0x30] sm:$0xf]
      %v264 = vld [vmem:[%s0 + $0x34] sm:$0xf]
      %v265 = vld [vmem:[%s0 + $0x38] sm:$0xf]
      %v266 = vld [vmem:[%s0 + $0x3c] sm:$0xf]
      %v267 = vld [vmem:[%s1] sm:$0x3]
      %v268 = vld [vmem:[%s236] sm:$0xff]
      %v269 = vld [vmem:[%s236 + $0x8] sm:$0xff]
      %v270 = vld [vmem:[%s236 + $0x10] sm:$0xff]
      %v271 = vld [vmem:[%s236 + $0x18] sm:$0xff]
      %v272 = vld [vmem:[%s236 + $0x20] sm:$0xff]
      %v273 = vld [vmem:[%s236 + $0x28] sm:$0xff]
      %v274 = vld [vmem:[%s236 + $0x30] sm:$0xff]
      %v275 = vld [vmem:[%s236 + $0x38] sm:$0xff]
      %v276 = vld [vmem:[%s242] sm:$0xf]
      %v277 = vld [vmem:[%s242 + $0x4] sm:$0xf]
      %v278 = vld [vmem:[%s242 + $0x8] sm:$0xf]
      %v279 = vld [vmem:[%s242 + $0xc] sm:$0xf]
      %v280 = vld [vmem:[%s242 + $0x10] sm:$0xf]
      %v281 = vld [vmem:[%s242 + $0x14] sm:$0xf]
      %v282 = vld [vmem:[%s242 + $0x18] sm:$0xf]
      %v283 = vld [vmem:[%s242 + $0x1c] sm:$0xf]
      %v284 = vunpack.c.l.bf16 %v276
      %v285 = vunpack.c.l.bf16 %v277
      %v286 = vunpack.c.l.bf16 %v278
      %v287 = vunpack.c.l.bf16 %v279
      %v288 = vunpack.c.l.bf16 %v280
      %v289 = vunpack.c.l.bf16 %v281
      %v290 = vunpack.c.l.bf16 %v282
      %v291 = vunpack.c.l.bf16 %v283
      %v292 = vld [vmem:[%s4] sm:$0x1]
      %294 = vset.pattern.permute.xlu0 0
      %295 = vperm.xlu0 %294, %v268
      %v296 = vpop.permute.xlu0 %295
      %299 = vset.pattern.permute.xlu0 0
      %300 = vperm.xlu0 %299, %v269
      %v301 = vpop.permute.xlu0 %300
      %304 = vset.pattern.permute.xlu0 0
      %305 = vperm.xlu0 %304, %v270
      %v306 = vpop.permute.xlu0 %305
      %309 = vset.pattern.permute.xlu0 0
      %310 = vperm.xlu0 %309, %v271
      %v311 = vpop.permute.xlu0 %310
      %314 = vset.pattern.permute.xlu0 0
      %315 = vperm.xlu0 %314, %v272
      %v316 = vpop.permute.xlu0 %315
      %319 = vset.pattern.permute.xlu0 0
      %320 = vperm.xlu0 %319, %v273
      %v321 = vpop.permute.xlu0 %320
      %324 = vset.pattern.permute.xlu0 0
      %325 = vperm.xlu0 %324, %v274
      %v326 = vpop.permute.xlu0 %325
      %329 = vset.pattern.permute.xlu0 0
      %330 = vperm.xlu0 %329, %v275
      %v331 = vpop.permute.xlu0 %330
      %v333 = vlaneseq
      %v334 = vshrl.u32 %v333, 7
      %v335 = vsub.s32 0, %v334
      %v336 = vrot.slane %v267, %v335
      %v337 = vadd.f32 %v296, %v336
      %v338 = vadd.f32 %v301, %v336
      %v339 = vadd.f32 %v306, %v336
      %v340 = vadd.f32 %v311, %v336
      %v341 = vadd.f32 %v316, %v336
      %v342 = vadd.f32 %v321, %v336
      %v343 = vadd.f32 %v326, %v336
      %v344 = vadd.f32 %v331, %v336
      %vm345 = vcmp.gt.f32.partialorder %v337, 0.0
      %vm346 = vcmp.gt.f32.partialorder %v338, 0.0
      %vm347 = vcmp.gt.f32.partialorder %v339, 0.0
      %vm348 = vcmp.gt.f32.partialorder %v340, 0.0
      %vm349 = vcmp.gt.f32.partialorder %v341, 0.0
      %vm350 = vcmp.gt.f32.partialorder %v342, 0.0
      %vm351 = vcmp.gt.f32.partialorder %v343, 0.0
      %vm352 = vcmp.gt.f32.partialorder %v344, 0.0
      %v353 = vmul.f32 %v337, 0.2
      %v354 = vmul.f32 %v338, 0.2
      %v355 = vmul.f32 %v339, 0.2
      %v356 = vmul.f32 %v340, 0.2
      %v357 = vmul.f32 %v341, 0.2
      %v358 = vmul.f32 %v342, 0.2
      %v359 = vmul.f32 %v343, 0.2
      %v360 = vmul.f32 %v344, 0.2
      %v361 = vsel %vm345, %v337, %v353
      %v362 = vsel %vm346, %v338, %v354
      %v363 = vsel %vm347, %v339, %v355
      %v364 = vsel %vm348, %v340, %v356
      %v365 = vsel %vm349, %v341, %v357
      %v366 = vsel %vm350, %v342, %v358
      %v367 = vsel %vm351, %v343, %v359
      %v368 = vsel %vm352, %v344, %v360
      %v369 = vadd.f32 %v361, %v284
      %v370 = vadd.f32 %v362, %v285
      %v371 = vadd.f32 %v363, %v286
      %v372 = vadd.f32 %v364, %v287
      %v373 = vadd.f32 %v365, %v288
      %v374 = vadd.f32 %v366, %v289
      %v375 = vadd.f32 %v367, %v290
      %v376 = vadd.f32 %v368, %v291
      %377 = vmax.xlane.f32.xlu0 %v369
      %v378 = vpop.xlane.xlu0 %377
      %379 = vmax.xlane.f32.xlu0 %v370
      %v380 = vpop.xlane.xlu0 %379
      %381 = vmax.xlane.f32.xlu0 %v371
      %v382 = vpop.xlane.xlu0 %381
      %383 = vmax.xlane.f32.xlu0 %v372
      %v384 = vpop.xlane.xlu0 %383
      %385 = vmax.xlane.f32.xlu0 %v373
      %v386 = vpop.xlane.xlu0 %385
      %387 = vmax.xlane.f32.xlu0 %v374
      %v388 = vpop.xlane.xlu0 %387
      %389 = vmax.xlane.f32.xlu0 %v375
      %v390 = vpop.xlane.xlu0 %389
      %391 = vmax.xlane.f32.xlu0 %v376
      %v392 = vpop.xlane.xlu0 %391
      %v393 = vsub.f32 %v369, %v378
      %v394 = vsub.f32 %v370, %v380
      %v395 = vsub.f32 %v371, %v382
      %v396 = vsub.f32 %v372, %v384
      %v397 = vsub.f32 %v373, %v386
      %v398 = vsub.f32 %v374, %v388
      %v399 = vsub.f32 %v375, %v390
      %v400 = vsub.f32 %v376, %v392
      %v401 = vmul.f32 %v393, 1.442695
      %v402 = vpow.pop %v401
      %v403 = vmul.f32 %v394, 1.442695
      %v404 = vpow.pop %v403
      %v405 = vmul.f32 %v395, 1.442695
      %v406 = vpow.pop %v405
      %v407 = vmul.f32 %v396, 1.442695
      %v408 = vpow.pop %v407
      %v409 = vmul.f32 %v397, 1.442695
      %v410 = vpow.pop %v409
      %v411 = vmul.f32 %v398, 1.442695
      %v412 = vpow.pop %v411
      %v413 = vmul.f32 %v399, 1.442695
      %v414 = vpow.pop %v413
      %v415 = vmul.f32 %v400, 1.442695
      %v416 = vpow.pop %v415
      %417 = vadd.xlane.f32.xlu0 %v402
      %v418 = vpop.xlane.xlu0 %417
      %419 = vadd.xlane.f32.xlu0 %v404
      %v420 = vpop.xlane.xlu0 %419
      %421 = vadd.xlane.f32.xlu0 %v406
      %v422 = vpop.xlane.xlu0 %421
      %423 = vadd.xlane.f32.xlu0 %v408
      %v424 = vpop.xlane.xlu0 %423
      %425 = vadd.xlane.f32.xlu0 %v410
      %v426 = vpop.xlane.xlu0 %425
      %427 = vadd.xlane.f32.xlu0 %v412
      %v428 = vpop.xlane.xlu0 %427
      %429 = vadd.xlane.f32.xlu0 %v414
      %v430 = vpop.xlane.xlu0 %429
      %431 = vadd.xlane.f32.xlu0 %v416
      %v432 = vpop.xlane.xlu0 %431
      %v433 = vpack.c.bf16 %v404, %v402
      %v434 = vpack.c.bf16 %v408, %v406
      %v435 = vpack.c.bf16 %v412, %v410
      %v436 = vpack.c.bf16 %v416, %v414
      %v453 = vunpack.c.l.b16 %v251
      %v454 = vunpack.c.l.b16 %v252
      %v455 = vunpack.c.l.b16 %v253
      %v456 = vunpack.c.l.b16 %v254
      %v457 = vunpack.c.l.b16 %v255
      %v458 = vunpack.c.l.b16 %v256
      %v459 = vunpack.c.l.b16 %v257
      %v460 = vunpack.c.l.b16 %v258
      %v461 = vunpack.c.l.b16 %v259
      %v462 = vunpack.c.l.b16 %v260
      %v463 = vunpack.c.l.b16 %v261
      %v464 = vunpack.c.l.b16 %v262
      %v465 = vunpack.c.l.b16 %v263
      %v466 = vunpack.c.l.b16 %v264
      %v467 = vunpack.c.l.b16 %v265
      %v468 = vunpack.c.l.b16 %v266
      %v469 = vpack.c.b16 %v454, %v453
      %v470 = vpack.c.b16 %v456, %v455
      %v471 = vpack.c.b16 %v458, %v457
      %v472 = vpack.c.b16 %v460, %v459
      %v473 = vpack.c.b16 %v462, %v461
      %v474 = vpack.c.b16 %v464, %v463
      %v475 = vpack.c.b16 %v466, %v465
      %v476 = vpack.c.b16 %v468, %v467
      %485 = vmatprep.subr.bf16.mxu0 0
      %486 = vmatpush1.bf16.msra.mxu0 %v476
      %487 = vmatprep.subr.bf16.mxu0 0
      %488 = vmatpush1.bf16.msra.mxu0 %v475
      %489 = vmatprep.subr.bf16.mxu0 0
      %490 = vmatpush1.bf16.msra.mxu0 %v474
      %491 = vmatprep.subr.bf16.mxu0 0
      %492 = vmatpush1.bf16.msra.mxu0 %v473
      %493 = vmatprep.subr.bf16.mxu0 0
      %494 = vmatpush1.bf16.msra.mxu0 %v472
      %495 = vmatprep.subr.bf16.mxu0 0
      %496 = vmatpush1.bf16.msra.mxu0 %v471
      %497 = vmatprep.subr.bf16.mxu0 0
      %498 = vmatpush1.bf16.msra.mxu0 %v470
      %499 = vmatprep.subr.bf16.mxu0 0
      %500 = vmatpush1.bf16.msra.mxu0 %v469
      %501 = vmatprep.subr.bf16.mxu0 0
      %502 = vmatpush2.bf16.msra.mxu0 0
      %503 = vmatprep.subr.bf16.mxu0 0
      %504 = vmatpush2.bf16.msra.mxu0 0
      %505 = vmatprep.subr.bf16.mxu0 0
      %506 = vmatpush2.bf16.msra.mxu0 0
      %507 = vmatprep.subr.bf16.mxu0 0
      %508 = vmatpush2.bf16.msra.mxu0 0
      %509 = vmatprep.subr.bf16.mxu0 0
      %510 = vmatpush2.bf16.msra.mxu0 0
      %511 = vmatprep.subr.bf16.mxu0 0
      %512 = vmatpush2.bf16.msra.mxu0 0
      %513 = vmatprep.subr.bf16.mxu0 0
      %514 = vmatpush2.bf16.msra.mxu0 0
      %515 = vmatprep.subr.bf16.mxu0 0
      %516 = vmatpush2.bf16.msra.mxu0 0
      %517 = vmatprep.mubr.bf16.mxu0 0
      %518 = vmatmul.mubr.bf16.gmra.mxu0 %v433
      %v519 = vpop.f32.mrf.mxu0
      %v520 = vadd.f32 0.0, %v519
      %v521 = vpop.f32.mrf.mxu0
      %v522 = vpop.f32.mrf.mxu0
      %v523 = vadd.f32 0.0, %v522
      %v524 = vpop.f32.mrf.mxu0
      %525 = vmatprep.mubr.bf16.mxu0 0
      %526 = vmatmul.mubr.bf16.gmra.mxu0 %v434
      %v527 = vpop.f32.mrf.mxu0
      %v528 = vadd.f32 0.0, %v527
      %v529 = vpop.f32.mrf.mxu0
      %v530 = vpop.f32.mrf.mxu0
      %v531 = vadd.f32 0.0, %v530
      %v532 = vpop.f32.mrf.mxu0
      %533 = vmatprep.mubr.bf16.mxu0 0
      %534 = vmatmul.mubr.bf16.gmra.mxu0 %v435
      %v535 = vpop.f32.mrf.mxu0
      %v536 = vadd.f32 0.0, %v535
      %v537 = vpop.f32.mrf.mxu0
      %v538 = vpop.f32.mrf.mxu0
      %v539 = vadd.f32 0.0, %v538
      %v540 = vpop.f32.mrf.mxu0
      %541 = vmatprep.mubr.bf16.mxu0 0
      %542 = vmatmul.mubr.bf16.gmra.mxu0 %v436
      %v543 = vpop.f32.mrf.mxu0
      %v544 = vadd.f32 0.0, %v543
      %v545 = vpop.f32.mrf.mxu0
      %v546 = vpop.f32.mrf.mxu0
      %v547 = vadd.f32 0.0, %v546
      %v548 = vpop.f32.mrf.mxu0
      %549 = vdwg.mxu0
      %v550 = vrcp.pop %v418
      %v551 = vrcp.pop %v420
      %v552 = vrcp.pop %v422
      %v553 = vrcp.pop %v424
      %v554 = vrcp.pop %v426
      %v555 = vrcp.pop %v428
      %v556 = vrcp.pop %v430
      %v557 = vrcp.pop %v432
      %v558 = vmul.f32 %v520, %v550
      %v559 = vmul.f32 %v523, %v551
      %v560 = vmul.f32 %v528, %v552
      %v561 = vmul.f32 %v531, %v553
      %v562 = vmul.f32 %v536, %v554
      %v563 = vmul.f32 %v539, %v555
      %v564 = vmul.f32 %v544, %v556
      %v565 = vmul.f32 %v547, %v557
      %v567 = vlaneseq
      %v568 = vshrl.u32 %v567, 7
      %v569 = vsub.s32 0, %v568
      %v570 = vrot.slane %v292, %v569
      %v572 = vadd.f32 %v558, %v570
      %v573 = vadd.f32 %v559, %v570
      %v574 = vadd.f32 %v560, %v570
      %v575 = vadd.f32 %v561, %v570
      %v576 = vadd.f32 %v562, %v570
      %v577 = vadd.f32 %v563, %v570
      %v578 = vadd.f32 %v564, %v570
      %v579 = vadd.f32 %v565, %v570
      %vm580 = vcmask 64512
      %581 = vst.msk [vmem:[%s248] sm:$0xff] %vm580, %v572
      %582 = vst.msk [vmem:[%s248 + $0x8] sm:$0xff] %vm580, %v573
      %583 = vst.msk [vmem:[%s248 + $0x10] sm:$0xff] %vm580, %v574
      %584 = vst.msk [vmem:[%s248 + $0x18] sm:$0xff] %vm580, %v575
      %585 = vst.msk [vmem:[%s248 + $0x20] sm:$0xff] %vm580, %v576
      %586 = vst.msk [vmem:[%s248 + $0x28] sm:$0xff] %vm580, %v577
      %587 = vst.msk [vmem:[%s248 + $0x30] sm:$0xff] %vm580, %v578
      %588 = vst.msk [vmem:[%s248 + $0x38] sm:$0xff] %vm580, %v579
      %589 = vset.pattern.permute.xlu0 1
      %590 = vperm.xlu0 %589, %v268
      %v591 = vpop.permute.xlu0 %590
      %593 = vset.pattern.permute.xlu0 1
      %594 = vperm.xlu0 %593, %v269
      %v595 = vpop.permute.xlu0 %594
      %597 = vset.pattern.permute.xlu0 1
      %598 = vperm.xlu0 %597, %v270
      %v599 = vpop.permute.xlu0 %598
      %601 = vset.pattern.permute.xlu0 1
      %602 = vperm.xlu0 %601, %v271
      %v603 = vpop.permute.xlu0 %602
      %605 = vset.pattern.permute.xlu0 1
      %606 = vperm.xlu0 %605, %v272
      %v607 = vpop.permute.xlu0 %606
      %609 = vset.pattern.permute.xlu0 1
      %610 = vperm.xlu0 %609, %v273
      %v611 = vpop.permute.xlu0 %610
      %613 = vset.pattern.permute.xlu0 1
      %614 = vperm.xlu0 %613, %v274
      %v615 = vpop.permute.xlu0 %614
      %617 = vset.pattern.permute.xlu0 1
      %618 = vperm.xlu0 %617, %v275
      %v619 = vpop.permute.xlu0 %618
      %v621 = vlaneseq
      %v622 = vshrl.u32 %v621, 7
      %v623 = vsub.s32 1, %v622
      %v624 = vrot.slane %v267, %v623
      %v625 = vadd.f32 %v591, %v624
      %v626 = vadd.f32 %v595, %v624
      %v627 = vadd.f32 %v599, %v624
      %v628 = vadd.f32 %v603, %v624
      %v629 = vadd.f32 %v607, %v624
      %v630 = vadd.f32 %v611, %v624
      %v631 = vadd.f32 %v615, %v624
      %v632 = vadd.f32 %v619, %v624
      %vm633 = vcmp.gt.f32.partialorder %v625, 0.0
      %vm634 = vcmp.gt.f32.partialorder %v626, 0.0
      %vm635 = vcmp.gt.f32.partialorder %v627, 0.0
      %vm636 = vcmp.gt.f32.partialorder %v628, 0.0
      %vm637 = vcmp.gt.f32.partialorder %v629, 0.0
      %vm638 = vcmp.gt.f32.partialorder %v630, 0.0
      %vm639 = vcmp.gt.f32.partialorder %v631, 0.0
      %vm640 = vcmp.gt.f32.partialorder %v632, 0.0
      %v641 = vmul.f32 %v625, 0.2
      %v642 = vmul.f32 %v626, 0.2
      %v643 = vmul.f32 %v627, 0.2
      %v644 = vmul.f32 %v628, 0.2
      %v645 = vmul.f32 %v629, 0.2
      %v646 = vmul.f32 %v630, 0.2
      %v647 = vmul.f32 %v631, 0.2
      %v648 = vmul.f32 %v632, 0.2
      %v649 = vsel %vm633, %v625, %v641
      %v650 = vsel %vm634, %v626, %v642
      %v651 = vsel %vm635, %v627, %v643
      %v652 = vsel %vm636, %v628, %v644
      %v653 = vsel %vm637, %v629, %v645
      %v654 = vsel %vm638, %v630, %v646
      %v655 = vsel %vm639, %v631, %v647
      %v656 = vsel %vm640, %v632, %v648
      %v657 = vadd.f32 %v649, %v284
      %v658 = vadd.f32 %v650, %v285
      %v659 = vadd.f32 %v651, %v286
      %v660 = vadd.f32 %v652, %v287
      %v661 = vadd.f32 %v653, %v288
      %v662 = vadd.f32 %v654, %v289
      %v663 = vadd.f32 %v655, %v290
      %v664 = vadd.f32 %v656, %v291
      %665 = vmax.xlane.f32.xlu0 %v657
      %v666 = vpop.xlane.xlu0 %665
      %667 = vmax.xlane.f32.xlu0 %v658
      %v668 = vpop.xlane.xlu0 %667
      %669 = vmax.xlane.f32.xlu0 %v659
      %v670 = vpop.xlane.xlu0 %669
      %671 = vmax.xlane.f32.xlu0 %v660
      %v672 = vpop.xlane.xlu0 %671
      %673 = vmax.xlane.f32.xlu0 %v661
      %v674 = vpop.xlane.xlu0 %673
      %675 = vmax.xlane.f32.xlu0 %v662
      %v676 = vpop.xlane.xlu0 %675
      %677 = vmax.xlane.f32.xlu0 %v663
      %v678 = vpop.xlane.xlu0 %677
      %679 = vmax.xlane.f32.xlu0 %v664
      %v680 = vpop.xlane.xlu0 %679
      %v681 = vsub.f32 %v657, %v666
      %v682 = vsub.f32 %v658, %v668
      %v683 = vsub.f32 %v659, %v670
      %v684 = vsub.f32 %v660, %v672
      %v685 = vsub.f32 %v661, %v674
      %v686 = vsub.f32 %v662, %v676
      %v687 = vsub.f32 %v663, %v678
      %v688 = vsub.f32 %v664, %v680
      %v689 = vmul.f32 %v681, 1.442695
      %v690 = vpow.pop %v689
      %v691 = vmul.f32 %v682, 1.442695
      %v692 = vpow.pop %v691
      %v693 = vmul.f32 %v683, 1.442695
      %v694 = vpow.pop %v693
      %v695 = vmul.f32 %v684, 1.442695
      %v696 = vpow.pop %v695
      %v697 = vmul.f32 %v685, 1.442695
      %v698 = vpow.pop %v697
      %v699 = vmul.f32 %v686, 1.442695
      %v700 = vpow.pop %v699
      %v701 = vmul.f32 %v687, 1.442695
      %v702 = vpow.pop %v701
      %v703 = vmul.f32 %v688, 1.442695
      %v704 = vpow.pop %v703
      %705 = vadd.xlane.f32.xlu0 %v690
      %v706 = vpop.xlane.xlu0 %705
      %707 = vadd.xlane.f32.xlu0 %v692
      %v708 = vpop.xlane.xlu0 %707
      %709 = vadd.xlane.f32.xlu0 %v694
      %v710 = vpop.xlane.xlu0 %709
      %711 = vadd.xlane.f32.xlu0 %v696
      %v712 = vpop.xlane.xlu0 %711
      %713 = vadd.xlane.f32.xlu0 %v698
      %v714 = vpop.xlane.xlu0 %713
      %715 = vadd.xlane.f32.xlu0 %v700
      %v716 = vpop.xlane.xlu0 %715
      %717 = vadd.xlane.f32.xlu0 %v702
      %v718 = vpop.xlane.xlu0 %717
      %719 = vadd.xlane.f32.xlu0 %v704
      %v720 = vpop.xlane.xlu0 %719
      %v721 = vpack.c.bf16 %v692, %v690
      %v722 = vpack.c.bf16 %v696, %v694
      %v723 = vpack.c.bf16 %v700, %v698
      %v724 = vpack.c.bf16 %v704, %v702
      %725 = vrot.lane.b32.xlu0 %v469, 120
      %v726 = vpop.permute.xlu0 %725
      %727 = vrot.lane.b32.xlu0 %v470, 120
      %v728 = vpop.permute.xlu0 %727
      %729 = vrot.lane.b32.xlu0 %v471, 120
      %v730 = vpop.permute.xlu0 %729
      %731 = vrot.lane.b32.xlu0 %v472, 120
      %v732 = vpop.permute.xlu0 %731
      %733 = vrot.lane.b32.xlu0 %v473, 120
      %v734 = vpop.permute.xlu0 %733
      %735 = vrot.lane.b32.xlu0 %v474, 120
      %v736 = vpop.permute.xlu0 %735
      %737 = vrot.lane.b32.xlu0 %v475, 120
      %v738 = vpop.permute.xlu0 %737
      %739 = vrot.lane.b32.xlu0 %v476, 120
      %v740 = vpop.permute.xlu0 %739
      %749 = vmatprep.subr.bf16.mxu0 0
      %750 = vmatpush1.bf16.msra.mxu0 %v740
      %751 = vmatprep.subr.bf16.mxu0 0
      %752 = vmatpush1.bf16.msra.mxu0 %v738
      %753 = vmatprep.subr.bf16.mxu0 0
      %754 = vmatpush1.bf16.msra.mxu0 %v736
      %755 = vmatprep.subr.bf16.mxu0 0
      %756 = vmatpush1.bf16.msra.mxu0 %v734
      %757 = vmatprep.subr.bf16.mxu0 0
      %758 = vmatpush1.bf16.msra.mxu0 %v732
      %759 = vmatprep.subr.bf16.mxu0 0
      %760 = vmatpush1.bf16.msra.mxu0 %v730
      %761 = vmatprep.subr.bf16.mxu0 0
      %762 = vmatpush1.bf16.msra.mxu0 %v728
      %763 = vmatprep.subr.bf16.mxu0 0
      %764 = vmatpush1.bf16.msra.mxu0 %v726
      %765 = vmatprep.subr.bf16.mxu0 0
      %766 = vmatpush2.bf16.msra.mxu0 0
      %767 = vmatprep.subr.bf16.mxu0 0
      %768 = vmatpush2.bf16.msra.mxu0 0
      %769 = vmatprep.subr.bf16.mxu0 0
      %770 = vmatpush2.bf16.msra.mxu0 0
      %771 = vmatprep.subr.bf16.mxu0 0
      %772 = vmatpush2.bf16.msra.mxu0 0
      %773 = vmatprep.subr.bf16.mxu0 0
      %774 = vmatpush2.bf16.msra.mxu0 0
      %775 = vmatprep.subr.bf16.mxu0 0
      %776 = vmatpush2.bf16.msra.mxu0 0
      %777 = vmatprep.subr.bf16.mxu0 0
      %778 = vmatpush2.bf16.msra.mxu0 0
      %779 = vmatprep.subr.bf16.mxu0 0
      %780 = vmatpush2.bf16.msra.mxu0 0
      %781 = vmatprep.mubr.bf16.mxu0 0
      %782 = vmatmul.mubr.bf16.gmra.mxu0 %v721
      %v783 = vpop.f32.mrf.mxu0
      %v784 = vadd.f32 0.0, %v783
      %v785 = vpop.f32.mrf.mxu0
      %v786 = vpop.f32.mrf.mxu0
      %v787 = vadd.f32 0.0, %v786
      %v788 = vpop.f32.mrf.mxu0
      %789 = vmatprep.mubr.bf16.mxu0 0
      %790 = vmatmul.mubr.bf16.gmra.mxu0 %v722
      %v791 = vpop.f32.mrf.mxu0
      %v792 = vadd.f32 0.0, %v791
      %v793 = vpop.f32.mrf.mxu0
      %v794 = vpop.f32.mrf.mxu0
      %v795 = vadd.f32 0.0, %v794
      %v796 = vpop.f32.mrf.mxu0
      %797 = vmatprep.mubr.bf16.mxu0 0
      %798 = vmatmul.mubr.bf16.gmra.mxu0 %v723
      %v799 = vpop.f32.mrf.mxu0
      %v800 = vadd.f32 0.0, %v799
      %v801 = vpop.f32.mrf.mxu0
      %v802 = vpop.f32.mrf.mxu0
      %v803 = vadd.f32 0.0, %v802
      %v804 = vpop.f32.mrf.mxu0
      %805 = vmatprep.mubr.bf16.mxu0 0
      %806 = vmatmul.mubr.bf16.gmra.mxu0 %v724
      %v807 = vpop.f32.mrf.mxu0
      %v808 = vadd.f32 0.0, %v807
      %v809 = vpop.f32.mrf.mxu0
      %v810 = vpop.f32.mrf.mxu0
      %v811 = vadd.f32 0.0, %v810
      %v812 = vpop.f32.mrf.mxu0
      %813 = vdwg.mxu0
      %v814 = vrcp.pop %v706
      %v815 = vrcp.pop %v708
      %v816 = vrcp.pop %v710
      %v817 = vrcp.pop %v712
      %v818 = vrcp.pop %v714
      %v819 = vrcp.pop %v716
      %v820 = vrcp.pop %v718
      %v821 = vrcp.pop %v720
      %v822 = vmul.f32 %v784, %v814
      %v823 = vmul.f32 %v787, %v815
      %v824 = vmul.f32 %v792, %v816
      %v825 = vmul.f32 %v795, %v817
      %v826 = vmul.f32 %v800, %v818
      %v827 = vmul.f32 %v803, %v819
      %v828 = vmul.f32 %v808, %v820
      %v829 = vmul.f32 %v811, %v821
      %830 = vrot.lane.b32.xlu0 %v570, 120
      %v831 = vpop.permute.xlu0 %830
      %v833 = vadd.f32 %v822, %v831
      %v834 = vadd.f32 %v823, %v831
      %v835 = vadd.f32 %v824, %v831
      %v836 = vadd.f32 %v825, %v831
      %v837 = vadd.f32 %v826, %v831
      %v838 = vadd.f32 %v827, %v831
      %v839 = vadd.f32 %v828, %v831
      %v840 = vadd.f32 %v829, %v831
      %849 = vrot.lane.b32.xlu0 %v833, 8
      %v850 = vpop.permute.xlu0 %849
      %851 = vrot.lane.b32.xlu0 %v834, 8
      %v852 = vpop.permute.xlu0 %851
      %853 = vrot.lane.b32.xlu0 %v835, 8
      %v854 = vpop.permute.xlu0 %853
      %855 = vrot.lane.b32.xlu0 %v836, 8
      %v856 = vpop.permute.xlu0 %855
      %857 = vrot.lane.b32.xlu0 %v837, 8
      %v858 = vpop.permute.xlu0 %857
      %859 = vrot.lane.b32.xlu0 %v838, 8
      %v860 = vpop.permute.xlu0 %859
      %861 = vrot.lane.b32.xlu0 %v839, 8
      %v862 = vpop.permute.xlu0 %861
      %863 = vrot.lane.b32.xlu0 %v840, 8
      %v864 = vpop.permute.xlu0 %863
      %vm873 = vcmask 130112
      %874 = vst.msk [vmem:[%s248] sm:$0xff] %vm873, %v850
      %875 = vst.msk [vmem:[%s248 + $0x8] sm:$0xff] %vm873, %v852
      %876 = vst.msk [vmem:[%s248 + $0x10] sm:$0xff] %vm873, %v854
      %877 = vst.msk [vmem:[%s248 + $0x18] sm:$0xff] %vm873, %v856
      %878 = vst.msk [vmem:[%s248 + $0x20] sm:$0xff] %vm873, %v858
      %879 = vst.msk [vmem:[%s248 + $0x28] sm:$0xff] %vm873, %v860
      %880 = vst.msk [vmem:[%s248 + $0x30] sm:$0xff] %vm873, %v862
      %881 = vst.msk [vmem:[%s248 + $0x38] sm:$0xff] %vm873, %v864
      %s882 = smul.u32 8, %s16
      %p883 = scmp.lt.s32.totalorder %s882, 15
      %s884 = scalar_select %p883, %s882, 15
      %s885 = smul.addr %s884, 8
      %s886 = scalar_lea.vmem %s5, %s885
      // Predicated region
      $region41: #{tpu_custom_call.1} parent=39 // pred_check
        %p887 = pneg %p149
      $region42: #{tpu_custom_call.1} parent=39 // pred_check_branch
        %889 = sbr.rel (%p887) target = $region44
      $region43: #{tpu_custom_call.1} parent=39 // pred_region
        %s890 = smul.u32 8, %s16
      $region44: #{tpu_custom_call.1} parent=39 // pred_fallthru
        _
    $region40: #{tpu_custom_call.1} parent=5 // pred_fallthru
      _
    %p891 = scmp.le.s32.totalorder 2, %s11
    // Predicated region
    $region45: #{tpu_custom_call.1} parent=5 // pred_check
      %p892 = pneg %p891
    $region46: #{tpu_custom_call.1} parent=5 // pred_check_branch
      %894 = sbr.rel (%p892) target = $region48
    $region47: #{tpu_custom_call.1} parent=5 // pred_region
      %s895 = ssub.s32 %s11, 2
      // Predicated region
      $region49: #{tpu_custom_call.1} parent=47 // pred_check
        %p896 = pneg %p155
      $region50: #{tpu_custom_call.1} parent=47 // pred_check_branch
        %898 = sbr.rel (%p896) target = $region52
      $region51: #{tpu_custom_call.1} parent=47 // pred_region
        %s899 = smul.u32 8, %s17
        %p900 = scmp.lt.s32.totalorder %s899, 15
        %s901 = scalar_select %p900, %s899, 15
        %s902 = smul.addr %s901, 8
        %s903 = scalar_lea.vmem %s5, %s902
      $region52: #{tpu_custom_call.1} parent=47 // pred_fallthru
        _
    $region48: #{tpu_custom_call.1} parent=5 // pred_fallthru
      _
  $region6: #{tpu_custom_call.1} parent=0 // loop_footer
    %s15 = sadd.s32 1, %s11
  $region7: #{tpu_custom_call.1} parent=0 // loop_footer_branch
    %10 = sbr.rel target = $region3
  $region8: #{tpu_custom_call.1} parent=0 // loop_exit
    _

</llo_original>
